<compile_context>
chip_gen: v7x
topology: tpu7x:2x2x1
jax: 0.10.0
libtpu: 0.0.40
codegen_flags: <defaults>
</compile_context>

<pallas_src>
import functools

import jax
import jax.numpy as jnp
import numpy as np
from jax.experimental import pallas as pl
from jax.experimental.pallas import tpu as pltpu

LANES = 128


# ----------------------------------------------------------------------------
# __init__ glue: slopes + tridiagonal solve (matches CubicSpline._solve_linear_system)
# ----------------------------------------------------------------------------
def build_spline_params(x, f):
    """x: (N,) knot locations, f: scalar->scalar function. Returns (x, y, ys)."""
    x = jnp.asarray(x, dtype=jnp.float32)
    y = f(x).astype(jnp.float32)
    ysgrad = jax.vmap(jax.grad(f))(x)          # d f / d x at the knots (autograd)
    y0s = ysgrad[0] * (x[1] - x[0])
    yns = ysgrad[-1] * (x[-1] - x[-2])

    n = y.shape[0]
    A = (4.0 * jnp.eye(n - 2, dtype=jnp.float32)
         + jnp.diag(jnp.ones(n - 3, dtype=jnp.float32), 1)
         + jnp.diag(jnp.ones(n - 3, dtype=jnp.float32), -1))
    b = 3.0 * (y[2:] - y[:-2])
    b = b.at[0].add(-y0s)
    b = b.at[n - 3].add(-yns)
    c = jnp.linalg.solve(A, b)
    ys = jnp.concatenate([y0s[None], c, yns[None]]).astype(jnp.float32)
    return x, y, ys


def build_hermite_tables(xk, yk, ysk):
    """Precompute per-interval reparametrization + Horner coefficient tables.

    Note: knots must be strictly increasing (same requirement as the torch
    reference); duplicate knots would produce inf/NaN via 1/dx.
    """
    xk = xk.astype(jnp.float32)
    yk = yk.astype(jnp.float32)
    ysk = ysk.astype(jnp.float32)
    dx = xk[1:] - xk[:-1]
    scale = 1.0 / dx                           # u = t*scale + off  (no vector divide)
    off = -xk[:-1] * scale
    a = 2.0 * yk[:-1] - 2.0 * yk[1:] + ysk[:-1] + ysk[1:]
    b = -3.0 * yk[:-1] + 3.0 * yk[1:] - 2.0 * ysk[:-1] - ysk[1:]
    c = ysk[:-1]
    d = yk[:-1]
    return scale, off, a, b, c, d


def _is_uniform_grid(xk):
    """True iff knots are (numerically) evenly spaced. Checked at trace time
    on concrete knots; traced knots conservatively return False."""
    try:
        xnp = np.asarray(xk, dtype=np.float64)
    except Exception:
        return False
    d = np.diff(xnp)
    if d.size <= 1:
        return True
    spread = float(d.max() - d.min())
    return spread <= 2e-6 * max(float(np.max(np.abs(d))), 1e-30)


# ----------------------------------------------------------------------------
# Pallas kernel: forward() hot path
# ----------------------------------------------------------------------------
def spline_kernel(xk_ref, sc_ref, of_ref, a_ref, b_ref, c_ref, d_ref,
                  t_ref, o_ref, *, n_intervals, uniform_scale):
    # Knot / coefficient tables live in SMEM; t / o are large VMEM tiles.
    t = t_ref[...].astype(jnp.float32)         # upcast narrow dtypes in-kernel

    # Gather the per-element interval coefficients with a select chain:
    # 1 compare + 5-6 selects per interval (later intervals overwrite wherever
    # t has passed their left knot), then evaluate the cubic ONCE.
    off = of_ref[0]
    ca = a_ref[0]
    cb = b_ref[0]
    cc = c_ref[0]
    cd = d_ref[0]
    sc = sc_ref[0]
    for i in range(1, n_intervals):
        m = t >= xk_ref[i]
        off = jnp.where(m, of_ref[i], off)
        ca = jnp.where(m, a_ref[i], ca)
        cb = jnp.where(m, b_ref[i], cb)
        cc = jnp.where(m, c_ref[i], cc)
        cd = jnp.where(m, d_ref[i], cd)
        if not uniform_scale:                  # uniform knots: scale is constant
            sc = jnp.where(m, sc_ref[i], sc)

    u = t * sc + off                           # u = (t - x_i) / dx_i, no divide
    s = ((ca * u + cb) * u + cc) * u + cd      # single Horner evaluation

    # Outside [x0, xN] the torch where-loop leaves 0; enforce that once.
    in_range = (t >= xk_ref[0]) & (t <= xk_ref[n_intervals])
    o_ref[...] = jnp.where(in_range, s, 0.0).astype(o_ref.dtype)


def _launch(slab, tile_rows, xk, scale, off, ca, cb, cc, cd, *,
            n_intervals, uniform, out_dtype):
    rows, cols = slab.shape
    grid = rows // tile_rows
    kernel = functools.partial(spline_kernel, n_intervals=n_intervals,
                               uniform_scale=uniform)
    smem = pl.BlockSpec(memory_space=pltpu.MemorySpace.SMEM)
    return pl.pallas_call(
        kernel,
        out_shape=jax.ShapeDtypeStruct((rows, cols), out_dtype),
        grid=(grid,),
        in_specs=[smem, smem, smem, smem, smem, smem, smem,              # tables
                  pl.BlockSpec((tile_rows, cols), lambda i: (i, 0))],    # t tile
        out_specs=pl.BlockSpec((tile_rows, cols), lambda i: (i, 0)),
        compiler_params=pltpu.CompilerParams(
            dimension_semantics=("parallel",)),
    )(xk.astype(jnp.float32), scale, off, ca, cb, cc, cd, slab)


def cubic_spline_forward(t, xk, yk, ysk, *, max_tile_rows=2048):
    """Evaluate the cubic spline elementwise on t (any shape / size / dtype)."""
    orig_shape = t.shape
    orig_dtype = t.dtype
    n_intervals = int(xk.shape[0]) - 1
    scale, off, ca, cb, cc, cd = build_hermite_tables(xk, yk, ysk)
    uniform = _is_uniform_grid(xk)
    tables = (xk, scale, off, ca, cb, cc, cd)
    kw = dict(n_intervals=n_intervals, uniform=uniform, out_dtype=orig_dtype)

    flat = t.reshape(-1)
    n = flat.shape[0]
    itemsize = jnp.dtype(orig_dtype).itemsize
    sub = 8 * max(1, 4 // max(1, itemsize))    # sublane granularity: 8 f32, 16 bf16

    # ---- Path 1: lane-dense slab, zero-copy (free reshape, no pad, no slice).
    if n > 0 and n % LANES == 0:
        rows = n // LANES
        tile_rows = rows
        if rows % sub == 0 and rows > sub:
            # Largest sub-aligned divisor of rows <= min(max_tile_rows, rows//2):
            # guarantees >= 2 grid steps (both v7x TensorCores get work) with
            # blocks up to 1 MiB to amortize the ~0.35us per-step overhead.
            cap = min(max_tile_rows, rows // 2)
            d = (cap // sub) * sub
            while d >= sub:
                if rows % d == 0:
                    tile_rows = d
                    break
                d -= sub
        if tile_rows * LANES * 4 <= (4 << 20):   # keep blocks comfortably in VMEM
            out = _launch(flat.reshape(rows, LANES), tile_rows, *tables, **kw)
            return out.reshape(orig_shape)

    # ---- Path 2: small ragged input -> one whole-array block (no pad, no slice).
    if n > 0:
        if len(orig_shape) >= 2:
            rows, cols = n // orig_shape[-1], orig_shape[-1]
        else:
            rows, cols = 1, n
        padded_bytes = (-(-rows // 8) * 8) * (-(-cols // LANES) * LANES) * 4
        if padded_bytes <= (2 << 20):
            out = _launch(flat.reshape(rows, cols), rows, *tables, **kw)
            return out.reshape(orig_shape)

    # ---- Path 3: large ragged fallback -> pad to a lane-dense slab, strip tail.
    # TODO(synk): remove this extra HBM pad/slice pass with an in-kernel masked
    # tail store (scalar-prefetched valid length + pltpu.store(..., mask=...)).
    rows = -(-max(n, 1) // LANES)
    rows = -(-rows // sub) * sub
    tile_rows = min(max_tile_rows, rows)
    rows_padded = -(-rows // tile_rows) * tile_rows
    total = rows_padded * LANES
    flat_p = jnp.pad(flat, (0, total - n)) if total != n else flat
    out = _launch(flat_p.reshape(rows_padded, LANES), tile_rows, *tables, **kw)
    return out.reshape(-1)[:n].reshape(orig_shape)


# ----------------------------------------------------------------------------
# Pure-JAX reference (exactly the torch where-loop / expanded polynomial)
# ----------------------------------------------------------------------------
def spline_reference(t, xk, yk, ysk):
    s = jnp.zeros_like(t)
    n = xk.shape[0] - 1
    for i in range(n):
        u = (t - xk[i]) / (xk[i + 1] - xk[i])
        h = (u ** 3 * (2 * yk[i] - 2 * yk[i + 1] + ysk[i] + ysk[i + 1])
             + u ** 2 * (-3 * yk[i] + 3 * yk[i + 1] - 2 * ysk[i] - ysk[i + 1])
             + u * ysk[i] + yk[i])
        s = jnp.where((xk[i] <= t) & (t <= xk[i + 1]), h, s)
    return s


if __name__ == "__main__":
    # Deterministic spline parameters: 9 knots of f = sin on [0, 2*pi]
    n_knots = 9
    knot_x = jnp.linspace(0.0, 2.0 * jnp.pi, n_knots)
    xk, yk, ysk = build_spline_params(knot_x, jnp.sin)

    key = jax.random.PRNGKey(0)
    k1, k2, k3 = jax.random.split(key, 3)

    # Lane-dense path: (2,4,16,16) = 2048 elems -> (16,128) slab, grid of 2 tiles.
    t = jax.random.uniform(k1, (2, 4, 16, 16),
                           minval=float(knot_x[0]), maxval=float(knot_x[-1]),
                           dtype=jnp.float32)
    out = jax.block_until_ready(cubic_spline_forward(t, xk, yk, ysk))
    ref = spline_reference(t, xk, yk, ysk)
    assert out.shape == t.shape and out.dtype == t.dtype
    assert jnp.allclose(out, ref, atol=1e-5, rtol=1e-5)

    # Ragged shape + out-of-range points: single whole-array block, no pad/slice.
    t2 = jax.random.uniform(k2, (3, 5, 7, 11),
                            minval=float(knot_x[0]) - 0.5,
                            maxval=float(knot_x[-1]) + 0.5,
                            dtype=jnp.float32)
    out2 = jax.block_until_ready(cubic_spline_forward(t2, xk, yk, ysk))
    ref2 = spline_reference(t2, xk, yk, ysk)
    assert out2.shape == t2.shape
    assert jnp.allclose(out2, ref2, atol=1e-5, rtol=1e-5)

    # bf16 in / bf16 out: kernel upcasts to f32 internally, stores bf16 directly.
    t3 = jax.random.uniform(k3, (2, 4, 16, 16),
                            minval=float(knot_x[0]), maxval=float(knot_x[-1]),
                            dtype=jnp.float32).astype(jnp.bfloat16)
    out3 = jax.block_until_ready(cubic_spline_forward(t3, xk, yk, ysk))
    ref3 = spline_reference(t3.astype(jnp.float32), xk, yk, ysk)
    assert out3.shape == t3.shape and out3.dtype == jnp.bfloat16
    assert jnp.allclose(out3.astype(jnp.float32), ref3, atol=2e-2, rtol=2e-2)

    print("KERNEL_OK")
</pallas_src>

<mosaic_0001>
module attributes {stable_mosaic.version = 11 : i64} {
  func.func @spline_kernel(%arg0: i32, %arg1: memref<9xf32, #tpu.memory_space<smem>>, %arg2: memref<8xf32, #tpu.memory_space<smem>>, %arg3: memref<8xf32, #tpu.memory_space<smem>>, %arg4: memref<8xf32, #tpu.memory_space<smem>>, %arg5: memref<8xf32, #tpu.memory_space<smem>>, %arg6: memref<8xf32, #tpu.memory_space<smem>>, %arg7: memref<8xf32, #tpu.memory_space<smem>>, %arg8: memref<8x128xf32, #tpu.memory_space<vmem>>, %arg9: memref<8x128xf32, #tpu.memory_space<vmem>>) attributes {dimension_semantics = [#tpu.dimension_semantics<parallel>], iteration_bounds = array<i64: 2>, scalar_prefetch = 0 : i64, scratch_operands = 0 : i64, tpu.core_type = #tpu.core_type<tc>, window_params = [{transform_indices = @transform_0, window_bounds = array<i64: 9>}, {transform_indices = @transform_1, window_bounds = array<i64: 8>}, {transform_indices = @transform_2, window_bounds = array<i64: 8>}, {transform_indices = @transform_3, window_bounds = array<i64: 8>}, {transform_indices = @transform_4, window_bounds = array<i64: 8>}, {transform_indices = @transform_5, window_bounds = array<i64: 8>}, {transform_indices = @transform_6, window_bounds = array<i64: 8>}, {transform_indices = @transform_7, window_bounds = array<i64: 8, 128>}, {transform_indices = @transform_8, window_bounds = array<i64: 8, 128>}]} {
    %c0 = arith.constant 0 : index
    %c0_0 = arith.constant 0 : index
    %0 = vector.load %arg8[%c0, %c0_0] : memref<8x128xf32, #tpu.memory_space<vmem>>, vector<8x128xf32>
    %c0_1 = arith.constant 0 : index
    %1 = memref.load %arg3[%c0_1] : memref<8xf32, #tpu.memory_space<smem>>
    %c0_2 = arith.constant 0 : index
    %2 = memref.load %arg4[%c0_2] : memref<8xf32, #tpu.memory_space<smem>>
    %c0_3 = arith.constant 0 : index
    %3 = memref.load %arg5[%c0_3] : memref<8xf32, #tpu.memory_space<smem>>
    %c0_4 = arith.constant 0 : index
    %4 = memref.load %arg6[%c0_4] : memref<8xf32, #tpu.memory_space<smem>>
    %c0_5 = arith.constant 0 : index
    %5 = memref.load %arg7[%c0_5] : memref<8xf32, #tpu.memory_space<smem>>
    %c0_6 = arith.constant 0 : index
    %6 = memref.load %arg2[%c0_6] : memref<8xf32, #tpu.memory_space<smem>>
    %c1 = arith.constant 1 : index
    %7 = memref.load %arg1[%c1] : memref<9xf32, #tpu.memory_space<smem>>
    %8 = vector.broadcast %7 : f32 to vector<8x128xf32>
    %9 = arith.cmpf oge, %0, %8 : vector<8x128xf32>
    %c1_7 = arith.constant 1 : index
    %10 = memref.load %arg3[%c1_7] : memref<8xf32, #tpu.memory_space<smem>>
    %11 = vector.broadcast %10 : f32 to vector<8x128xf32>
    %12 = vector.broadcast %1 : f32 to vector<8x128xf32>
    %13 = arith.select %9, %11, %12 : vector<8x128xi1>, vector<8x128xf32>
    %c1_8 = arith.constant 1 : index
    %14 = memref.load %arg4[%c1_8] : memref<8xf32, #tpu.memory_space<smem>>
    %15 = vector.broadcast %14 : f32 to vector<8x128xf32>
    %16 = vector.broadcast %2 : f32 to vector<8x128xf32>
    %17 = arith.select %9, %15, %16 : vector<8x128xi1>, vector<8x128xf32>
    %c1_9 = arith.constant 1 : index
    %18 = memref.load %arg5[%c1_9] : memref<8xf32, #tpu.memory_space<smem>>
    %19 = vector.broadcast %18 : f32 to vector<8x128xf32>
    %20 = vector.broadcast %3 : f32 to vector<8x128xf32>
    %21 = arith.select %9, %19, %20 : vector<8x128xi1>, vector<8x128xf32>
    %c1_10 = arith.constant 1 : index
    %22 = memref.load %arg6[%c1_10] : memref<8xf32, #tpu.memory_space<smem>>
    %23 = vector.broadcast %22 : f32 to vector<8x128xf32>
    %24 = vector.broadcast %4 : f32 to vector<8x128xf32>
    %25 = arith.select %9, %23, %24 : vector<8x128xi1>, vector<8x128xf32>
    %c1_11 = arith.constant 1 : index
    %26 = memref.load %arg7[%c1_11] : memref<8xf32, #tpu.memory_space<smem>>
    %27 = vector.broadcast %26 : f32 to vector<8x128xf32>
    %28 = vector.broadcast %5 : f32 to vector<8x128xf32>
    %29 = arith.select %9, %27, %28 : vector<8x128xi1>, vector<8x128xf32>
    %c2 = arith.constant 2 : index
    %30 = memref.load %arg1[%c2] : memref<9xf32, #tpu.memory_space<smem>>
    %31 = vector.broadcast %30 : f32 to vector<8x128xf32>
    %32 = arith.cmpf oge, %0, %31 : vector<8x128xf32>
    %c2_12 = arith.constant 2 : index
    %33 = memref.load %arg3[%c2_12] : memref<8xf32, #tpu.memory_space<smem>>
    %34 = vector.broadcast %33 : f32 to vector<8x128xf32>
    %35 = arith.select %32, %34, %13 : vector<8x128xi1>, vector<8x128xf32>
    %c2_13 = arith.constant 2 : index
    %36 = memref.load %arg4[%c2_13] : memref<8xf32, #tpu.memory_space<smem>>
    %37 = vector.broadcast %36 : f32 to vector<8x128xf32>
    %38 = arith.select %32, %37, %17 : vector<8x128xi1>, vector<8x128xf32>
    %c2_14 = arith.constant 2 : index
    %39 = memref.load %arg5[%c2_14] : memref<8xf32, #tpu.memory_space<smem>>
    %40 = vector.broadcast %39 : f32 to vector<8x128xf32>
    %41 = arith.select %32, %40, %21 : vector<8x128xi1>, vector<8x128xf32>
    %c2_15 = arith.constant 2 : index
    %42 = memref.load %arg6[%c2_15] : memref<8xf32, #tpu.memory_space<smem>>
    %43 = vector.broadcast %42 : f32 to vector<8x128xf32>
    %44 = arith.select %32, %43, %25 : vector<8x128xi1>, vector<8x128xf32>
    %c2_16 = arith.constant 2 : index
    %45 = memref.load %arg7[%c2_16] : memref<8xf32, #tpu.memory_space<smem>>
    %46 = vector.broadcast %45 : f32 to vector<8x128xf32>
    %47 = arith.select %32, %46, %29 : vector<8x128xi1>, vector<8x128xf32>
    %c3 = arith.constant 3 : index
    %48 = memref.load %arg1[%c3] : memref<9xf32, #tpu.memory_space<smem>>
    %49 = vector.broadcast %48 : f32 to vector<8x128xf32>
    %50 = arith.cmpf oge, %0, %49 : vector<8x128xf32>
    %c3_17 = arith.constant 3 : index
    %51 = memref.load %arg3[%c3_17] : memref<8xf32, #tpu.memory_space<smem>>
    %52 = vector.broadcast %51 : f32 to vector<8x128xf32>
    %53 = arith.select %50, %52, %35 : vector<8x128xi1>, vector<8x128xf32>
    %c3_18 = arith.constant 3 : index
    %54 = memref.load %arg4[%c3_18] : memref<8xf32, #tpu.memory_space<smem>>
    %55 = vector.broadcast %54 : f32 to vector<8x128xf32>
    %56 = arith.select %50, %55, %38 : vector<8x128xi1>, vector<8x128xf32>
    %c3_19 = arith.constant 3 : index
    %57 = memref.load %arg5[%c3_19] : memref<8xf32, #tpu.memory_space<smem>>
    %58 = vector.broadcast %57 : f32 to vector<8x128xf32>
    %59 = arith.select %50, %58, %41 : vector<8x128xi1>, vector<8x128xf32>
    %c3_20 = arith.constant 3 : index
    %60 = memref.load %arg6[%c3_20] : memref<8xf32, #tpu.memory_space<smem>>
    %61 = vector.broadcast %60 : f32 to vector<8x128xf32>
    %62 = arith.select %50, %61, %44 : vector<8x128xi1>, vector<8x128xf32>
    %c3_21 = arith.constant 3 : index
    %63 = memref.load %arg7[%c3_21] : memref<8xf32, #tpu.memory_space<smem>>
    %64 = vector.broadcast %63 : f32 to vector<8x128xf32>
    %65 = arith.select %50, %64, %47 : vector<8x128xi1>, vector<8x128xf32>
    %c4 = arith.constant 4 : index
    %66 = memref.load %arg1[%c4] : memref<9xf32, #tpu.memory_space<smem>>
    %67 = vector.broadcast %66 : f32 to vector<8x128xf32>
    %68 = arith.cmpf oge, %0, %67 : vector<8x128xf32>
    %c4_22 = arith.constant 4 : index
    %69 = memref.load %arg3[%c4_22] : memref<8xf32, #tpu.memory_space<smem>>
    %70 = vector.broadcast %69 : f32 to vector<8x128xf32>
    %71 = arith.select %68, %70, %53 : vector<8x128xi1>, vector<8x128xf32>
    %c4_23 = arith.constant 4 : index
    %72 = memref.load %arg4[%c4_23] : memref<8xf32, #tpu.memory_space<smem>>
    %73 = vector.broadcast %72 : f32 to vector<8x128xf32>
    %74 = arith.select %68, %73, %56 : vector<8x128xi1>, vector<8x128xf32>
    %c4_24 = arith.constant 4 : index
    %75 = memref.load %arg5[%c4_24] : memref<8xf32, #tpu.memory_space<smem>>
    %76 = vector.broadcast %75 : f32 to vector<8x128xf32>
    %77 = arith.select %68, %76, %59 : vector<8x128xi1>, vector<8x128xf32>
    %c4_25 = arith.constant 4 : index
    %78 = memref.load %arg6[%c4_25] : memref<8xf32, #tpu.memory_space<smem>>
    %79 = vector.broadcast %78 : f32 to vector<8x128xf32>
    %80 = arith.select %68, %79, %62 : vector<8x128xi1>, vector<8x128xf32>
    %c4_26 = arith.constant 4 : index
    %81 = memref.load %arg7[%c4_26] : memref<8xf32, #tpu.memory_space<smem>>
    %82 = vector.broadcast %81 : f32 to vector<8x128xf32>
    %83 = arith.select %68, %82, %65 : vector<8x128xi1>, vector<8x128xf32>
    %c5 = arith.constant 5 : index
    %84 = memref.load %arg1[%c5] : memref<9xf32, #tpu.memory_space<smem>>
    %85 = vector.broadcast %84 : f32 to vector<8x128xf32>
    %86 = arith.cmpf oge, %0, %85 : vector<8x128xf32>
    %c5_27 = arith.constant 5 : index
    %87 = memref.load %arg3[%c5_27] : memref<8xf32, #tpu.memory_space<smem>>
    %88 = vector.broadcast %87 : f32 to vector<8x128xf32>
    %89 = arith.select %86, %88, %71 : vector<8x128xi1>, vector<8x128xf32>
    %c5_28 = arith.constant 5 : index
    %90 = memref.load %arg4[%c5_28] : memref<8xf32, #tpu.memory_space<smem>>
    %91 = vector.broadcast %90 : f32 to vector<8x128xf32>
    %92 = arith.select %86, %91, %74 : vector<8x128xi1>, vector<8x128xf32>
    %c5_29 = arith.constant 5 : index
    %93 = memref.load %arg5[%c5_29] : memref<8xf32, #tpu.memory_space<smem>>
    %94 = vector.broadcast %93 : f32 to vector<8x128xf32>
    %95 = arith.select %86, %94, %77 : vector<8x128xi1>, vector<8x128xf32>
    %c5_30 = arith.constant 5 : index
    %96 = memref.load %arg6[%c5_30] : memref<8xf32, #tpu.memory_space<smem>>
    %97 = vector.broadcast %96 : f32 to vector<8x128xf32>
    %98 = arith.select %86, %97, %80 : vector<8x128xi1>, vector<8x128xf32>
    %c5_31 = arith.constant 5 : index
    %99 = memref.load %arg7[%c5_31] : memref<8xf32, #tpu.memory_space<smem>>
    %100 = vector.broadcast %99 : f32 to vector<8x128xf32>
    %101 = arith.select %86, %100, %83 : vector<8x128xi1>, vector<8x128xf32>
    %c6 = arith.constant 6 : index
    %102 = memref.load %arg1[%c6] : memref<9xf32, #tpu.memory_space<smem>>
    %103 = vector.broadcast %102 : f32 to vector<8x128xf32>
    %104 = arith.cmpf oge, %0, %103 : vector<8x128xf32>
    %c6_32 = arith.constant 6 : index
    %105 = memref.load %arg3[%c6_32] : memref<8xf32, #tpu.memory_space<smem>>
    %106 = vector.broadcast %105 : f32 to vector<8x128xf32>
    %107 = arith.select %104, %106, %89 : vector<8x128xi1>, vector<8x128xf32>
    %c6_33 = arith.constant 6 : index
    %108 = memref.load %arg4[%c6_33] : memref<8xf32, #tpu.memory_space<smem>>
    %109 = vector.broadcast %108 : f32 to vector<8x128xf32>
    %110 = arith.select %104, %109, %92 : vector<8x128xi1>, vector<8x128xf32>
    %c6_34 = arith.constant 6 : index
    %111 = memref.load %arg5[%c6_34] : memref<8xf32, #tpu.memory_space<smem>>
    %112 = vector.broadcast %111 : f32 to vector<8x128xf32>
    %113 = arith.select %104, %112, %95 : vector<8x128xi1>, vector<8x128xf32>
    %c6_35 = arith.constant 6 : index
    %114 = memref.load %arg6[%c6_35] : memref<8xf32, #tpu.memory_space<smem>>
    %115 = vector.broadcast %114 : f32 to vector<8x128xf32>
    %116 = arith.select %104, %115, %98 : vector<8x128xi1>, vector<8x128xf32>
    %c6_36 = arith.constant 6 : index
    %117 = memref.load %arg7[%c6_36] : memref<8xf32, #tpu.memory_space<smem>>
    %118 = vector.broadcast %117 : f32 to vector<8x128xf32>
    %119 = arith.select %104, %118, %101 : vector<8x128xi1>, vector<8x128xf32>
    %c7 = arith.constant 7 : index
    %120 = memref.load %arg1[%c7] : memref<9xf32, #tpu.memory_space<smem>>
    %121 = vector.broadcast %120 : f32 to vector<8x128xf32>
    %122 = arith.cmpf oge, %0, %121 : vector<8x128xf32>
    %c7_37 = arith.constant 7 : index
    %123 = memref.load %arg3[%c7_37] : memref<8xf32, #tpu.memory_space<smem>>
    %124 = vector.broadcast %123 : f32 to vector<8x128xf32>
    %125 = arith.select %122, %124, %107 : vector<8x128xi1>, vector<8x128xf32>
    %c7_38 = arith.constant 7 : index
    %126 = memref.load %arg4[%c7_38] : memref<8xf32, #tpu.memory_space<smem>>
    %127 = vector.broadcast %126 : f32 to vector<8x128xf32>
    %128 = arith.select %122, %127, %110 : vector<8x128xi1>, vector<8x128xf32>
    %c7_39 = arith.constant 7 : index
    %129 = memref.load %arg5[%c7_39] : memref<8xf32, #tpu.memory_space<smem>>
    %130 = vector.broadcast %129 : f32 to vector<8x128xf32>
    %131 = arith.select %122, %130, %113 : vector<8x128xi1>, vector<8x128xf32>
    %c7_40 = arith.constant 7 : index
    %132 = memref.load %arg6[%c7_40] : memref<8xf32, #tpu.memory_space<smem>>
    %133 = vector.broadcast %132 : f32 to vector<8x128xf32>
    %134 = arith.select %122, %133, %116 : vector<8x128xi1>, vector<8x128xf32>
    %c7_41 = arith.constant 7 : index
    %135 = memref.load %arg7[%c7_41] : memref<8xf32, #tpu.memory_space<smem>>
    %136 = vector.broadcast %135 : f32 to vector<8x128xf32>
    %137 = arith.select %122, %136, %119 : vector<8x128xi1>, vector<8x128xf32>
    %138 = vector.broadcast %6 : f32 to vector<8x128xf32>
    %139 = arith.mulf %0, %138 : vector<8x128xf32>
    %140 = arith.addf %139, %125 : vector<8x128xf32>
    %141 = arith.mulf %128, %140 : vector<8x128xf32>
    %142 = arith.addf %141, %131 : vector<8x128xf32>
    %143 = arith.mulf %142, %140 : vector<8x128xf32>
    %144 = arith.addf %143, %134 : vector<8x128xf32>
    %145 = arith.mulf %144, %140 : vector<8x128xf32>
    %146 = arith.addf %145, %137 : vector<8x128xf32>
    %c0_42 = arith.constant 0 : index
    %147 = memref.load %arg1[%c0_42] : memref<9xf32, #tpu.memory_space<smem>>
    %148 = vector.broadcast %147 : f32 to vector<8x128xf32>
    %149 = arith.cmpf oge, %0, %148 : vector<8x128xf32>
    %c8 = arith.constant 8 : index
    %150 = memref.load %arg1[%c8] : memref<9xf32, #tpu.memory_space<smem>>
    %151 = vector.broadcast %150 : f32 to vector<8x128xf32>
    %152 = arith.cmpf ole, %0, %151 : vector<8x128xf32>
    %153 = arith.andi %149, %152 : vector<8x128xi1>
    %cst = arith.constant 0.000000e+00 : f32
    %154 = vector.broadcast %cst : f32 to vector<8x128xf32>
    %155 = arith.select %153, %146, %154 : vector<8x128xi1>, vector<8x128xf32>
    %c0_43 = arith.constant 0 : index
    %c0_44 = arith.constant 0 : index
    %156 = vector.load %arg9[%c0_43, %c0_44] : memref<8x128xf32, #tpu.memory_space<vmem>>, vector<8x128xf32>
    tpu.vector_store %arg9[%c0_43, %c0_44], %155 {strides = array<i32>} : memref<8x128xf32, #tpu.memory_space<vmem>>, vector<8x128xf32>,
    return
  }
  func.func @transform_0(%arg0: i32) -> i32 {
    %c0_i32 = arith.constant 0 : i32
    %c0_i32_0 = arith.constant 0 : i32
    return %c0_i32 : i32
  }
  func.func @transform_1(%arg0: i32) -> i32 {
    %c0_i32 = arith.constant 0 : i32
    %c0_i32_0 = arith.constant 0 : i32
    return %c0_i32 : i32
  }
  func.func @transform_2(%arg0: i32) -> i32 {
    %c0_i32 = arith.constant 0 : i32
    %c0_i32_0 = arith.constant 0 : i32
    return %c0_i32 : i32
  }
  func.func @transform_3(%arg0: i32) -> i32 {
    %c0_i32 = arith.constant 0 : i32
    %c0_i32_0 = arith.constant 0 : i32
    return %c0_i32 : i32
  }
  func.func @transform_4(%arg0: i32) -> i32 {
    %c0_i32 = arith.constant 0 : i32
    %c0_i32_0 = arith.constant 0 : i32
    return %c0_i32 : i32
  }
  func.func @transform_5(%arg0: i32) -> i32 {
    %c0_i32 = arith.constant 0 : i32
    %c0_i32_0 = arith.constant 0 : i32
    return %c0_i32 : i32
  }
  func.func @transform_6(%arg0: i32) -> i32 {
    %c0_i32 = arith.constant 0 : i32
    %c0_i32_0 = arith.constant 0 : i32
    return %c0_i32 : i32
  }
  func.func @transform_7(%arg0: i32) -> (i32, i32) {
    %c0_i32 = arith.constant 0 : i32
    %c0_i32_0 = arith.constant 0 : i32
    return %arg0, %c0_i32 : i32, i32
  }
  func.func @transform_8(%arg0: i32) -> (i32, i32) {
    %c0_i32 = arith.constant 0 : i32
    %c0_i32_0 = arith.constant 0 : i32
    return %arg0, %c0_i32 : i32, i32
  }
}

</mosaic_0001>

<llo_original>
// kernel: tpu_custom_call.1
$region0: #{tpu_custom_call.1}
  #allocation0 [shape = 'u32[]', space=smem, size = 0x4, offset = 0x4, fixed_abs, tag = 'smem constant byte address 0x4 - core index']
  #allocation1 [shape = 'u32[144,128]{1,0:T(1,128)}', space=vmem, size = 0x12000, scoped, tag = 'internal scratch']
  %s0 = inlined_call_operand.hbm [shape: f32[9], index: 0, kind: input, shape index: {}]
  %s1 = inlined_call_operand.vmem [shape: f32[8], index: 1, kind: input, shape index: {}]
  %s2 = inlined_call_operand.vmem [shape: f32[8], index: 2, kind: input, shape index: {}]
  %s3 = inlined_call_operand.vmem [shape: f32[8], index: 3, kind: input, shape index: {}]
  %s4 = inlined_call_operand.vmem [shape: f32[8], index: 4, kind: input, shape index: {}]
  %s5 = inlined_call_operand.vmem [shape: f32[8], index: 5, kind: input, shape index: {}]
  %s6 = inlined_call_operand.vmem [shape: f32[8], index: 6, kind: input, shape index: {}]
  %s7 = inlined_call_operand.vmem [shape: f32[16,128], index: 7, kind: input, shape index: {}]
  %s8 = inlined_call_operand.hbm [shape: f32[16,128], index: 8, kind: output, shape index: {}]
  %s9 = sld [smem:[#allocation0]]
  $region93: #{tpu_custom_call.1} parent=0
    _
  %s11 = ssub.s32 1, %s9
  %s12 = scalar_select 0, %s11, %s9
  $region1: #{tpu_custom_call.1} parent=0
    #allocation2 [shape = 'u8[512]{0}', space=smem, size = 0x200, scoped, tag = 'input window, operand 0, single buffered']
    #allocation3 [shape = 's32[2]{0}', space=sflag, size = 0x8, scoped, tag = 'scoped memory for tpu_custom_call.1']
    #allocation4 [shape = 's32[2]{0}', space=sflag, size = 0x8, scoped, tag = 'scoped memory for tpu_custom_call.1']
    #allocation5 [shape = 's32[2]{0}', space=sflag, size = 0x8, scoped, tag = 'scoped memory for tpu_custom_call.1']
    #allocation6 [shape = 'u8[512]{0}', space=smem, size = 0x200, scoped, tag = 'input window, operand 1, single buffered']
    #allocation7 [shape = 'u8[512]{0}', space=smem, size = 0x200, scoped, tag = 'input window, operand 2, single buffered']
    #allocation8 [shape = 's32[1]{0}', space=sflag, size = 0x4, scoped, tag = 'scoped memory for tpu_custom_call.1']
    #allocation9 [shape = 'u8[512]{0}', space=smem, size = 0x200, scoped, tag = 'input window, operand 3, single buffered']
    #allocation10 [shape = 'u8[512]{0}', space=smem, size = 0x200, scoped, tag = 'input window, operand 4, single buffered']
    #allocation11 [shape = 's32[1]{0}', space=sflag, size = 0x4, scoped, tag = 'scoped memory for tpu_custom_call.1']
    #allocation12 [shape = 'u8[512]{0}', space=smem, size = 0x200, scoped, tag = 'input window, operand 5, single buffered']
    #allocation13 [shape = 'u8[512]{0}', space=smem, size = 0x200, scoped, tag = 'input window, operand 6, single buffered']
    #allocation14 [shape = 's32[1]{0}', space=sflag, size = 0x4, scoped, tag = 'scoped memory for tpu_custom_call.1']
    #allocation15 [shape = 'u8[8192]{0}', space=vmem, size = 0x2000, scoped, tag = 'output window, operand 0']
    %13 = vsyncpa [#allocation4], 0
    %14 = vsyncpa [#allocation5], 0
    %15 = vsyncpa [#allocation8], 0
    %16 = vsyncpa [#allocation11], 0
    %17 = vsyncpa [#allocation14], 0
    %18 = vsyncpa [#allocation3], 0
    %s19 = scalar_lea.sflag [#allocation3], 1
    %20 = vsyncpa %s19, 0
    loop: start=0, step=1, limit=4
    $region2: #{tpu_custom_call.1} parent=1 // loop_pre_header
      _
    $region3: #{tpu_custom_call.1} parent=1 // loop_header
      %s22 = sphi 0, %s26
      %p23 = scmp.ge.s32.totalorder %s22, 4
      %s30 = sphi 0, %s30
      %s32 = sphi 0, %s30
      %s33 = sphi 0, %s32
      %s47 = sphi 0, %s33
      %s51 = sphi 0, %s51
      %s53 = sphi 0, %s51
      %s54 = sphi 0, %s53
      %s68 = sphi 0, %s54
      %s72 = sphi 0, %s72
      %s74 = sphi 0, %s72
      %s75 = sphi 0, %s74
      %s89 = sphi 0, %s75
      %s93 = sphi 0, %s93
      %s95 = sphi 0, %s93
      %s96 = sphi 0, %s95
      %s110 = sphi 0, %s96
      %s114 = sphi 0, %s114
      %s116 = sphi 0, %s114
      %s117 = sphi 0, %s116
      %s131 = sphi 0, %s117
      %s135 = sphi 0, %s135
      %s137 = sphi 0, %s135
      %s138 = sphi 0, %s137
      %s152 = sphi 0, %s138
      %s156 = sphi 0, %s156
      %s158 = sphi 0, %s156
      %s159 = sphi 0, %s158
      %s173 = sphi 0, %s159
      %s179 = sphi 0, %s181
      %s182 = sphi 0, %s179
      %s183 = sphi 0, %s182
      %s199 = sphi 0, %s183
      %s205 = sphi 0, %s207
      %s208 = sphi 0, %s205
      %s209 = sphi 0, %s208
      %s225 = sphi 0, %s209
    $region4: #{tpu_custom_call.1} parent=1 // loop_header_branch
      %25 = sbr.rel (%p23) target = $region8
    $region5: #{tpu_custom_call.1} parent=1 // loop_body
      %s27 = ssub.s32 %s22, 1
      %s28 = ssub.s32 %s22, 2
      %s29 = sadd.s32 %s22, 1
      %s31 = sadd.s32 %s30, 1
      %p34 = scmp.eq.s32.totalorder %s22, 1
      %p35 = scmp.ne.s32.totalorder %s30, %s32
      %p36 = scmp.eq.s32.totalorder %s22, 0
      %p37 = por %p35, %p36
      %p38 = scmp.ne.s32.totalorder %s30, %s32
      %p39 = scmp.eq.s32.totalorder %s27, 1
      %p40 = por %p38, %p39
      %p41 = scmp.ne.s32.totalorder %s32, %s33
      %p42 = scmp.eq.s32.totalorder %s27, 0
      %p43 = por %p41, %p42
      %p44 = scmp.ne.s32.totalorder %s32, %s33
      %p45 = scmp.eq.s32.totalorder %s28, 1
      %p46 = por %p44, %p45
      %p48 = scmp.ne.s32.totalorder %s33, %s47
      %p49 = scmp.eq.s32.totalorder %s28, 0
      %p50 = por %p48, %p49
      %s52 = sadd.s32 %s51, 1
      %p55 = scmp.eq.s32.totalorder %s22, 1
      %p56 = scmp.ne.s32.totalorder %s51, %s53
      %p57 = scmp.eq.s32.totalorder %s22, 0
      %p58 = por %p56, %p57
      %p59 = scmp.ne.s32.totalorder %s51, %s53
      %p60 = scmp.eq.s32.totalorder %s27, 1
      %p61 = por %p59, %p60
      %p62 = scmp.ne.s32.totalorder %s53, %s54
      %p63 = scmp.eq.s32.totalorder %s27, 0
      %p64 = por %p62, %p63
      %p65 = scmp.ne.s32.totalorder %s53, %s54
      %p66 = scmp.eq.s32.totalorder %s28, 1
      %p67 = por %p65, %p66
      %p69 = scmp.ne.s32.totalorder %s54, %s68
      %p70 = scmp.eq.s32.totalorder %s28, 0
      %p71 = por %p69, %p70
      %s73 = sadd.s32 %s72, 1
      %p76 = scmp.eq.s32.totalorder %s22, 1
      %p77 = scmp.ne.s32.totalorder %s72, %s74
      %p78 = scmp.eq.s32.totalorder %s22, 0
      %p79 = por %p77, %p78
      %p80 = scmp.ne.s32.totalorder %s72, %s74
      %p81 = scmp.eq.s32.totalorder %s27, 1
      %p82 = por %p80, %p81
      %p83 = scmp.ne.s32.totalorder %s74, %s75
      %p84 = scmp.eq.s32.totalorder %s27, 0
      %p85 = por %p83, %p84
      %p86 = scmp.ne.s32.totalorder %s74, %s75
      %p87 = scmp.eq.s32.totalorder %s28, 1
      %p88 = por %p86, %p87
      %p90 = scmp.ne.s32.totalorder %s75, %s89
      %p91 = scmp.eq.s32.totalorder %s28, 0
      %p92 = por %p90, %p91
      %s94 = sadd.s32 %s93, 1
      %p97 = scmp.eq.s32.totalorder %s22, 1
      %p98 = scmp.ne.s32.totalorder %s93, %s95
      %p99 = scmp.eq.s32.totalorder %s22, 0
      %p100 = por %p98, %p99
      %p101 = scmp.ne.s32.totalorder %s93, %s95
      %p102 = scmp.eq.s32.totalorder %s27, 1
      %p103 = por %p101, %p102
      %p104 = scmp.ne.s32.totalorder %s95, %s96
      %p105 = scmp.eq.s32.totalorder %s27, 0
      %p106 = por %p104, %p105
      %p107 = scmp.ne.s32.totalorder %s95, %s96
      %p108 = scmp.eq.s32.totalorder %s28, 1
      %p109 = por %p107, %p108
      %p111 = scmp.ne.s32.totalorder %s96, %s110
      %p112 = scmp.eq.s32.totalorder %s28, 0
      %p113 = por %p111, %p112
      %s115 = sadd.s32 %s114, 1
      %p118 = scmp.eq.s32.totalorder %s22, 1
      %p119 = scmp.ne.s32.totalorder %s114, %s116
      %p120 = scmp.eq.s32.totalorder %s22, 0
      %p121 = por %p119, %p120
      %p122 = scmp.ne.s32.totalorder %s114, %s116
      %p123 = scmp.eq.s32.totalorder %s27, 1
      %p124 = por %p122, %p123
      %p125 = scmp.ne.s32.totalorder %s116, %s117
      %p126 = scmp.eq.s32.totalorder %s27, 0
      %p127 = por %p125, %p126
      %p128 = scmp.ne.s32.totalorder %s116, %s117
      %p129 = scmp.eq.s32.totalorder %s28, 1
      %p130 = por %p128, %p129
      %p132 = scmp.ne.s32.totalorder %s117, %s131
      %p133 = scmp.eq.s32.totalorder %s28, 0
      %p134 = por %p132, %p133
      %s136 = sadd.s32 %s135, 1
      %p139 = scmp.eq.s32.totalorder %s22, 1
      %p140 = scmp.ne.s32.totalorder %s135, %s137
      %p141 = scmp.eq.s32.totalorder %s22, 0
      %p142 = por %p140, %p141
      %p143 = scmp.ne.s32.totalorder %s135, %s137
      %p144 = scmp.eq.s32.totalorder %s27, 1
      %p145 = por %p143, %p144
      %p146 = scmp.ne.s32.totalorder %s137, %s138
      %p147 = scmp.eq.s32.totalorder %s27, 0
      %p148 = por %p146, %p147
      %p149 = scmp.ne.s32.totalorder %s137, %s138
      %p150 = scmp.eq.s32.totalorder %s28, 1
      %p151 = por %p149, %p150
      %p153 = scmp.ne.s32.totalorder %s138, %s152
      %p154 = scmp.eq.s32.totalorder %s28, 0
      %p155 = por %p153, %p154
      %s157 = sadd.s32 %s156, 1
      %p160 = scmp.eq.s32.totalorder %s22, 1
      %p161 = scmp.ne.s32.totalorder %s156, %s158
      %p162 = scmp.eq.s32.totalorder %s22, 0
      %p163 = por %p161, %p162
      %p164 = scmp.ne.s32.totalorder %s156, %s158
      %p165 = scmp.eq.s32.totalorder %s27, 1
      %p166 = por %p164, %p165
      %p167 = scmp.ne.s32.totalorder %s158, %s159
      %p168 = scmp.eq.s32.totalorder %s27, 0
      %p169 = por %p167, %p168
      %p170 = scmp.ne.s32.totalorder %s158, %s159
      %p171 = scmp.eq.s32.totalorder %s28, 1
      %p172 = por %p170, %p171
      %p174 = scmp.ne.s32.totalorder %s159, %s173
      %p175 = scmp.eq.s32.totalorder %s28, 0
      %p176 = por %p174, %p175
      %s177 = ssub.s32 %s22, %s29
      %p178 = scmp.eq.s32.totalorder %s177, 0
      %s180 = sadd.s32 %s179, 1
      %s181 = scalar_select %p178, %s179, %s180
      %p184 = pneg %p178
      %p185 = scmp.eq.s32.totalorder %s22, 1
      %p186 = por %p184, %p185
      %p187 = scmp.ne.s32.totalorder %s179, %s182
      %p188 = scmp.eq.s32.totalorder %s22, 0
      %p189 = por %p187, %p188
      %p190 = scmp.ne.s32.totalorder %s179, %s182
      %p191 = scmp.eq.s32.totalorder %s27, 1
      %p192 = por %p190, %p191
      %p193 = scmp.ne.s32.totalorder %s182, %s183
      %p194 = scmp.eq.s32.totalorder %s27, 0
      %p195 = por %p193, %p194
      %p196 = scmp.ne.s32.totalorder %s182, %s183
      %p197 = scmp.eq.s32.totalorder %s28, 1
      %p198 = por %p196, %p197
      %p200 = scmp.ne.s32.totalorder %s183, %s199
      %p201 = scmp.eq.s32.totalorder %s28, 0
      %p202 = por %p200, %p201
      %s203 = ssub.s32 %s22, %s29
      %p204 = scmp.eq.s32.totalorder %s203, 0
      %s206 = sadd.s32 %s205, 1
      %s207 = scalar_select %p204, %s205, %s206
      %p210 = pneg %p204
      %p211 = scmp.eq.s32.totalorder %s22, 1
      %p212 = por %p210, %p211
      %p213 = scmp.ne.s32.totalorder %s205, %s208
      %p214 = scmp.eq.s32.totalorder %s22, 0
      %p215 = por %p213, %p214
      %p216 = scmp.ne.s32.totalorder %s205, %s208
      %p217 = scmp.eq.s32.totalorder %s27, 1
      %p218 = por %p216, %p217
      %p219 = scmp.ne.s32.totalorder %s208, %s209
      %p220 = scmp.eq.s32.totalorder %s27, 0
      %p221 = por %p219, %p220
      %p222 = scmp.ne.s32.totalorder %s208, %s209
      %p223 = scmp.eq.s32.totalorder %s28, 1
      %p224 = por %p222, %p223
      %p226 = scmp.ne.s32.totalorder %s209, %s225
      %p227 = scmp.eq.s32.totalorder %s28, 0
      %p228 = por %p226, %p227
      %p229 = scmp.le.s32.totalorder 1, %s22
      %p230 = scmp.lt.s32.totalorder %s22, 3
      %p231 = pnand %p229, %p230
      %p232 = pneg %p231
      // Predicated region
      $region9: #{tpu_custom_call.1} parent=5 // pred_check
        _
      $region10: #{tpu_custom_call.1} parent=5 // pred_check_branch
        %234 = sbr.rel (%p231) target = $region12
      $region11: #{tpu_custom_call.1} parent=5 // pred_region
        %s235 = ssub.s32 %s22, 1
        // Predicated region
        $region13: #{tpu_custom_call.1} parent=11 // pred_check
          %p236 = pneg %p43
        $region14: #{tpu_custom_call.1} parent=11 // pred_check_branch
          %238 = sbr.rel (%p236) target = $region16
        $region15: #{tpu_custom_call.1} parent=11 // pred_region
          %s240 = ssub.s32 16, 16
          %241 = vsyncadd [#allocation4], %s240
          %244 = dma.hbm_to_smem %s0, 16, [#allocation2], [#allocation4]
        $region16: #{tpu_custom_call.1} parent=11 // pred_fallthru
          _
        // Predicated region
        $region17: #{tpu_custom_call.1} parent=11 // pred_check
          %p245 = pneg %p64
        $region18: #{tpu_custom_call.1} parent=11 // pred_check_branch
          %247 = sbr.rel (%p245) target = $region20
        $region19: #{tpu_custom_call.1} parent=11 // pred_region
          %s249 = ssub.s32 16, 16
          %250 = vsyncadd [#allocation5], %s249
          %s252 = sshll.u32 %s1, 4
          %s253 = int_to_ptr.vmem [resolvable:$true] %s252
          %255 = dma.vmem_to_smem %s253, 16, [#allocation6], [#allocation5]
        $region20: #{tpu_custom_call.1} parent=11 // pred_fallthru
          _
        // Predicated region
        $region21: #{tpu_custom_call.1} parent=11 // pred_check
          %p256 = pneg %p85
        $region22: #{tpu_custom_call.1} parent=11 // pred_check_branch
          %258 = sbr.rel (%p256) target = $region24
        $region23: #{tpu_custom_call.1} parent=11 // pred_region
          %s260 = ssub.s32 16, 16
          %261 = vsyncadd [#allocation8], %s260
          %s263 = sshll.u32 %s2, 4
          %s264 = int_to_ptr.vmem [resolvable:$true] %s263
          %266 = dma.vmem_to_smem %s264, 16, [#allocation7], [#allocation8]
        $region24: #{tpu_custom_call.1} parent=11 // pred_fallthru
          _
        // Predicated region
        $region25: #{tpu_custom_call.1} parent=11 // pred_check
          %p267 = pneg %p106
        $region26: #{tpu_custom_call.1} parent=11 // pred_check_branch
          %269 = sbr.rel (%p267) target = $region28
        $region27: #{tpu_custom_call.1} parent=11 // pred_region
          %s271 = ssub.s32 16, 16
          %272 = vsyncadd [#allocation8], %s271
          %s274 = sshll.u32 %s3, 4
          %s275 = int_to_ptr.vmem [resolvable:$true] %s274
          %277 = dma.vmem_to_smem %s275, 16, [#allocation9], [#allocation8]
        $region28: #{tpu_custom_call.1} parent=11 // pred_fallthru
          _
        // Predicated region
        $region29: #{tpu_custom_call.1} parent=11 // pred_check
          %p278 = pneg %p127
        $region30: #{tpu_custom_call.1} parent=11 // pred_check_branch
          %280 = sbr.rel (%p278) target = $region32
        $region31: #{tpu_custom_call.1} parent=11 // pred_region
          %s282 = ssub.s32 16, 16
          %283 = vsyncadd [#allocation11], %s282
          %s285 = sshll.u32 %s4, 4
          %s286 = int_to_ptr.vmem [resolvable:$true] %s285
          %288 = dma.vmem_to_smem %s286, 16, [#allocation10], [#allocation11]
        $region32: #{tpu_custom_call.1} parent=11 // pred_fallthru
          _
        // Predicated region
        $region33: #{tpu_custom_call.1} parent=11 // pred_check
          %p289 = pneg %p148
        $region34: #{tpu_custom_call.1} parent=11 // pred_check_branch
          %291 = sbr.rel (%p289) target = $region36
        $region35: #{tpu_custom_call.1} parent=11 // pred_region
          %s293 = ssub.s32 16, 16
          %294 = vsyncadd [#allocation11], %s293
          %s296 = sshll.u32 %s5, 4
          %s297 = int_to_ptr.vmem [resolvable:$true] %s296
          %299 = dma.vmem_to_smem %s297, 16, [#allocation12], [#allocation11]
        $region36: #{tpu_custom_call.1} parent=11 // pred_fallthru
          _
        // Predicated region
        $region37: #{tpu_custom_call.1} parent=11 // pred_check
          %p300 = pneg %p169
        $region38: #{tpu_custom_call.1} parent=11 // pred_check_branch
          %302 = sbr.rel (%p300) target = $region40
        $region39: #{tpu_custom_call.1} parent=11 // pred_region
          %s304 = ssub.s32 16, 16
          %305 = vsyncadd [#allocation14], %s304
          %s307 = sshll.u32 %s6, 4
          %s308 = int_to_ptr.vmem [resolvable:$true] %s307
          %310 = dma.vmem_to_smem %s308, 16, [#allocation13], [#allocation14]
        $region40: #{tpu_custom_call.1} parent=11 // pred_fallthru
          _
      $region12: #{tpu_custom_call.1} parent=5 // pred_fallthru
        _
      %p311 = scmp.lt.s32.totalorder %s22, 2
      // Predicated region
      $region41: #{tpu_custom_call.1} parent=5 // pred_check
        %p312 = pneg %p311
      $region42: #{tpu_custom_call.1} parent=5 // pred_check_branch
        %314 = sbr.rel (%p312) target = $region44
      $region43: #{tpu_custom_call.1} parent=5 // pred_region
        // Predicated region
        $region45: #{tpu_custom_call.1} parent=43 // pred_check
          %p315 = pneg %p189
        $region46: #{tpu_custom_call.1} parent=43 // pred_check_branch
          %317 = sbr.rel (%p315) target = $region48
        $region47: #{tpu_custom_call.1} parent=43 // pred_region
          %p318 = scmp.lt.s32.totalorder %s22, 1
          %s319 = scalar_select %p318, %s22, 1
          %s320 = smul.addr %s319, 8
          %s321 = scalar_lea.vmem %s7, %s320
        $region48: #{tpu_custom_call.1} parent=43 // pred_fallthru
          _
      $region44: #{tpu_custom_call.1} parent=5 // pred_fallthru
        _
      %p322 = scmp.le.s32.totalorder 1, %s22
      %p323 = scmp.lt.s32.totalorder %s22, 3
      %p324 = pnand %p322, %p323
      %p325 = pneg %p324
      // Predicated region
      $region49: #{tpu_custom_call.1} parent=5 // pred_check
        _
      $region50: #{tpu_custom_call.1} parent=5 // pred_check_branch
        %327 = sbr.rel (%p324) target = $region52
      $region51: #{tpu_custom_call.1} parent=5 // pred_region
        %s328 = ssub.s32 %s22, 1
        // Predicated region
        $region53: #{tpu_custom_call.1} parent=51 // pred_check
          %p329 = pneg %p43
        $region54: #{tpu_custom_call.1} parent=51 // pred_check_branch
          %331 = sbr.rel (%p329) target = $region56
        $region55: #{tpu_custom_call.1} parent=51 // pred_region
          %332 = dma.done [#allocation4], 16
        $region56: #{tpu_custom_call.1} parent=51 // pred_fallthru
          _
        // Predicated region
        $region57: #{tpu_custom_call.1} parent=51 // pred_check
          %p333 = pneg %p64
        $region58: #{tpu_custom_call.1} parent=51 // pred_check_branch
          %335 = sbr.rel (%p333) target = $region60
        $region59: #{tpu_custom_call.1} parent=51 // pred_region
          %336 = dma.done [#allocation5], 16
        $region60: #{tpu_custom_call.1} parent=51 // pred_fallthru
          _
        // Predicated region
        $region61: #{tpu_custom_call.1} parent=51 // pred_check
          %p337 = pneg %p85
        $region62: #{tpu_custom_call.1} parent=51 // pred_check_branch
          %339 = sbr.rel (%p337) target = $region64
        $region63: #{tpu_custom_call.1} parent=51 // pred_region
          %340 = dma.done [#allocation8], 16
        $region64: #{tpu_custom_call.1} parent=51 // pred_fallthru
          _
        // Predicated region
        $region65: #{tpu_custom_call.1} parent=51 // pred_check
          %p341 = pneg %p106
        $region66: #{tpu_custom_call.1} parent=51 // pred_check_branch
          %343 = sbr.rel (%p341) target = $region68
        $region67: #{tpu_custom_call.1} parent=51 // pred_region
          %344 = dma.done [#allocation8], 16
        $region68: #{tpu_custom_call.1} parent=51 // pred_fallthru
          _
        // Predicated region
        $region69: #{tpu_custom_call.1} parent=51 // pred_check
          %p345 = pneg %p127
        $region70: #{tpu_custom_call.1} parent=51 // pred_check_branch
          %347 = sbr.rel (%p345) target = $region72
        $region71: #{tpu_custom_call.1} parent=51 // pred_region
          %348 = dma.done [#allocation11], 16
        $region72: #{tpu_custom_call.1} parent=51 // pred_fallthru
          _
        // Predicated region
        $region73: #{tpu_custom_call.1} parent=51 // pred_check
          %p349 = pneg %p148
        $region74: #{tpu_custom_call.1} parent=51 // pred_check_branch
          %351 = sbr.rel (%p349) target = $region76
        $region75: #{tpu_custom_call.1} parent=51 // pred_region
          %352 = dma.done [#allocation11], 16
        $region76: #{tpu_custom_call.1} parent=51 // pred_fallthru
          _
        // Predicated region
        $region77: #{tpu_custom_call.1} parent=51 // pred_check
          %p353 = pneg %p169
        $region78: #{tpu_custom_call.1} parent=51 // pred_check_branch
          %355 = sbr.rel (%p353) target = $region80
        $region79: #{tpu_custom_call.1} parent=51 // pred_region
          %356 = dma.done [#allocation14], 16
        $region80: #{tpu_custom_call.1} parent=51 // pred_fallthru
          _
        %357 = sfence
        %p358 = pneg %p43
        %p359 = pneg %p40
        %p360 = pneg %p64
        %p361 = pneg %p61
        %p362 = pneg %p85
        %p363 = pneg %p82
        %p364 = pneg %p106
        %p365 = pneg %p103
        %p366 = pneg %p127
        %p367 = pneg %p124
        %p368 = pneg %p148
        %p369 = pneg %p145
        %p370 = pneg %p169
        %p371 = pneg %p166
        %p372 = scmp.lt.s32.totalorder %s27, 1
        %s373 = scalar_select %p372, %s27, 1
        %s374 = smul.addr %s373, 8
        %s375 = scalar_lea.vmem %s7, %s374
        %p376 = pneg %p195
        %p377 = pneg %p192
        %p378 = pneg %p221
        %p379 = pneg %p218
        %s380 = sand.u32 %s208, 1
        %s381 = scalar_lea.sflag [#allocation3], %s380
        %s382 = sand.u32 %s208, 1
        %s383 = smul.addr %s382, 8
        %s384 = scalar_lea.vmem [#allocation15], %s383
        %p385 = scmp.lt.s32.totalorder %s27, 1
        %s386 = scalar_select %p385, %s27, 1
        %s387 = smul.addr %s386, 8
        %s388 = scalar_lea.vmem %s7, %s387
        %v389 = vld [vmem:[%s388] sm:$0xff]
        %s390 = sld [smem:[#allocation7]]
        %s391 = sld [smem:[#allocation9]]
        %s392 = sld [smem:[#allocation10]]
        %s393 = sld [smem:[#allocation12]]
        %s394 = sld [smem:[#allocation13]]
        %s395 = sld [smem:[#allocation6]]
        %s396 = sld [smem:[#allocation2 + $0x1]]
        %v397 = vstv %s396
        %vm398 = vcmp.ge.f32.partialorder %v389, %v397
        %s399 = sld [smem:[#allocation7 + $0x1]]
        %v400 = vstv %s399
        %v401 = vstv %s390
        %v402 = vsel %vm398, %v400, %v401
        %s403 = sld [smem:[#allocation9 + $0x1]]
        %v404 = vstv %s403
        %v405 = vstv %s391
        %v406 = vsel %vm398, %v404, %v405
        %s407 = sld [smem:[#allocation10 + $0x1]]
        %v408 = vstv %s407
        %v409 = vstv %s392
        %v410 = vsel %vm398, %v408, %v409
        %s411 = sld [smem:[#allocation12 + $0x1]]
        %v412 = vstv %s411
        %v413 = vstv %s393
        %v414 = vsel %vm398, %v412, %v413
        %s415 = sld [smem:[#allocation13 + $0x1]]
        %v416 = vstv %s415
        %v417 = vstv %s394
        %v418 = vsel %vm398, %v416, %v417
        %s419 = sld [smem:[#allocation2 + $0x2]]
        %v420 = vstv %s419
        %vm421 = vcmp.ge.f32.partialorder %v389, %v420
        %s422 = sld [smem:[#allocation7 + $0x2]]
        %v423 = vstv %s422
        %v424 = vsel %vm421, %v423, %v402
        %s425 = sld [smem:[#allocation9 + $0x2]]
        %v426 = vstv %s425
        %v427 = vsel %vm421, %v426, %v406
        %s428 = sld [smem:[#allocation10 + $0x2]]
        %v429 = vstv %s428
        %v430 = vsel %vm421, %v429, %v410
        %s431 = sld [smem:[#allocation12 + $0x2]]
        %v432 = vstv %s431
        %v433 = vsel %vm421, %v432, %v414
        %s434 = sld [smem:[#allocation13 + $0x2]]
        %v435 = vstv %s434
        %v436 = vsel %vm421, %v435, %v418
        %s437 = sld [smem:[#allocation2 + $0x3]]
        %v438 = vstv %s437
        %vm439 = vcmp.ge.f32.partialorder %v389, %v438
        %s440 = sld [smem:[#allocation7 + $0x3]]
        %v441 = vstv %s440
        %v442 = vsel %vm439, %v441, %v424
        %s443 = sld [smem:[#allocation9 + $0x3]]
        %v444 = vstv %s443
        %v445 = vsel %vm439, %v444, %v427
        %s446 = sld [smem:[#allocation10 + $0x3]]
        %v447 = vstv %s446
        %v448 = vsel %vm439, %v447, %v430
        %s449 = sld [smem:[#allocation12 + $0x3]]
        %v450 = vstv %s449
        %v451 = vsel %vm439, %v450, %v433
        %s452 = sld [smem:[#allocation13 + $0x3]]
        %v453 = vstv %s452
        %v454 = vsel %vm439, %v453, %v436
        %s455 = sld [smem:[#allocation2 + $0x4]]
        %v456 = vstv %s455
        %vm457 = vcmp.ge.f32.partialorder %v389, %v456
        %s458 = sld [smem:[#allocation7 + $0x4]]
        %v459 = vstv %s458
        %v460 = vsel %vm457, %v459, %v442
        %s461 = sld [smem:[#allocation9 + $0x4]]
        %v462 = vstv %s461
        %v463 = vsel %vm457, %v462, %v445
        %s464 = sld [smem:[#allocation10 + $0x4]]
        %v465 = vstv %s464
        %v466 = vsel %vm457, %v465, %v448
        %s467 = sld [smem:[#allocation12 + $0x4]]
        %v468 = vstv %s467
        %v469 = vsel %vm457, %v468, %v451
        %s470 = sld [smem:[#allocation13 + $0x4]]
        %v471 = vstv %s470
        %v472 = vsel %vm457, %v471, %v454
        %s473 = sld [smem:[#allocation2 + $0x5]]
        %v474 = vstv %s473
        %vm475 = vcmp.ge.f32.partialorder %v389, %v474
        %s476 = sld [smem:[#allocation7 + $0x5]]
        %v477 = vstv %s476
        %v478 = vsel %vm475, %v477, %v460
        %s479 = sld [smem:[#allocation9 + $0x5]]
        %v480 = vstv %s479
        %v481 = vsel %vm475, %v480, %v463
        %s482 = sld [smem:[#allocation10 + $0x5]]
        %v483 = vstv %s482
        %v484 = vsel %vm475, %v483, %v466
        %s485 = sld [smem:[#allocation12 + $0x5]]
        %v486 = vstv %s485
        %v487 = vsel %vm475, %v486, %v469
        %s488 = sld [smem:[#allocation13 + $0x5]]
        %v489 = vstv %s488
        %v490 = vsel %vm475, %v489, %v472
        %s491 = sld [smem:[#allocation2 + $0x6]]
        %v492 = vstv %s491
        %vm493 = vcmp.ge.f32.partialorder %v389, %v492
        %s494 = sld [smem:[#allocation7 + $0x6]]
        %v495 = vstv %s494
        %v496 = vsel %vm493, %v495, %v478
        %s497 = sld [smem:[#allocation9 + $0x6]]
        %v498 = vstv %s497
        %v499 = vsel %vm493, %v498, %v481
        %s500 = sld [smem:[#allocation10 + $0x6]]
        %v501 = vstv %s500
        %v502 = vsel %vm493, %v501, %v484
        %s503 = sld [smem:[#allocation12 + $0x6]]
        %v504 = vstv %s503
        %v505 = vsel %vm493, %v504, %v487
        %s506 = sld [smem:[#allocation13 + $0x6]]
        %v507 = vstv %s506
        %v508 = vsel %vm493, %v507, %v490
        %s509 = sld [smem:[#allocation2 + $0x7]]
        %v510 = vstv %s509
        %vm511 = vcmp.ge.f32.partialorder %v389, %v510
        %s512 = sld [smem:[#allocation7 + $0x7]]
        %v513 = vstv %s512
        %v514 = vsel %vm511, %v513, %v496
        %s515 = sld [smem:[#allocation9 + $0x7]]
        %v516 = vstv %s515
        %v517 = vsel %vm511, %v516, %v499
        %s518 = sld [smem:[#allocation10 + $0x7]]
        %v519 = vstv %s518
        %v520 = vsel %vm511, %v519, %v502
        %s521 = sld [smem:[#allocation12 + $0x7]]
        %v522 = vstv %s521
        %v523 = vsel %vm511, %v522, %v505
        %s524 = sld [smem:[#allocation13 + $0x7]]
        %v525 = vstv %s524
        %v526 = vsel %vm511, %v525, %v508
        %v527 = vstv %s395
        %v528 = vmul.f32 %v389, %v527
        %v529 = vadd.f32 %v528, %v514
        %v530 = vmul.f32 %v517, %v529
        %v531 = vadd.f32 %v530, %v520
        %v532 = vmul.f32 %v531, %v529
        %v533 = vadd.f32 %v532, %v523
        %v534 = vmul.f32 %v533, %v529
        %v535 = vadd.f32 %v534, %v526
        %s536 = sld [smem:[#allocation2]]
        %v537 = vstv %s536
        %vm538 = vcmp.ge.f32.partialorder %v389, %v537
        %s539 = sld [smem:[#allocation2 + $0x8]]
        %v540 = vstv %s539
        %vm541 = vcmp.le.f32.partialorder %v389, %v540
        %vm542 = vmand %vm538, %vm541
        %v543 = vsel %vm542, %v535, 0.0
        %544 = vst [vmem:[%s384] sm:$0xff] %v543
        %s545 = sand.u32 %s208, 1
        %s546 = scalar_lea.sflag [#allocation3], %s545
        %s547 = sand.u32 %s208, 1
        %s548 = smul.addr %s547, 8
        %s549 = scalar_lea.vmem [#allocation15], %s548
        // Predicated region
        $region81: #{tpu_custom_call.1} parent=51 // pred_check
          %p550 = pneg %p218
        $region82: #{tpu_custom_call.1} parent=51 // pred_check_branch
          %552 = sbr.rel (%p550) target = $region84
        $region83: #{tpu_custom_call.1} parent=51 // pred_region
          %s554 = ssub.s32 128, 128
          %555 = vsyncadd %s546, %s554
          %s556 = smul.addr %s27, 128
          %s557 = scalar_lea.hbm %s8, %s556
          %s559 = sshll.u32 %s549, 4
          %s560 = int_to_ptr.vmem [resolvable:$true] %s559
          %562 = dma.vmem_to_hbm [thread:$0]  %s560, 128, %s557, %s546
        $region84: #{tpu_custom_call.1} parent=51 // pred_fallthru
          _
      $region52: #{tpu_custom_call.1} parent=5 // pred_fallthru
        _
      %p563 = scmp.le.s32.totalorder 2, %s22
      // Predicated region
      $region85: #{tpu_custom_call.1} parent=5 // pred_check
        %p564 = pneg %p563
      $region86: #{tpu_custom_call.1} parent=5 // pred_check_branch
        %566 = sbr.rel (%p564) target = $region88
      $region87: #{tpu_custom_call.1} parent=5 // pred_region
        %s567 = ssub.s32 %s22, 2
        // Predicated region
        $region89: #{tpu_custom_call.1} parent=87 // pred_check
          %p568 = pneg %p224
        $region90: #{tpu_custom_call.1} parent=87 // pred_check_branch
          %570 = sbr.rel (%p568) target = $region92
        $region91: #{tpu_custom_call.1} parent=87 // pred_region
          %s571 = sand.u32 %s209, 1
          %s572 = scalar_lea.sflag [#allocation3], %s571
          %s573 = sand.u32 %s209, 1
          %s574 = smul.addr %s573, 8
          %s575 = scalar_lea.vmem [#allocation15], %s574
          %576 = dma.done %s572, 128
        $region92: #{tpu_custom_call.1} parent=87 // pred_fallthru
          _
      $region88: #{tpu_custom_call.1} parent=5 // pred_fallthru
        _
    $region6: #{tpu_custom_call.1} parent=1 // loop_footer
      %s26 = sadd.s32 1, %s22
    $region7: #{tpu_custom_call.1} parent=1 // loop_footer_branch
      %21 = sbr.rel target = $region3
    $region8: #{tpu_custom_call.1} parent=1 // loop_exit
      _
    %577 = vsyncpa [#allocation3], 1
    %s578 = scalar_lea.sflag [#allocation3], 1
    %579 = vsyncpa %s578, 1
    %580 = vsyncpa [#allocation4], 1
    %s581 = scalar_lea.sflag [#allocation4], 1
    %582 = vsyncpa %s581, 1
    %583 = vsyncpa [#allocation5], 1
    %s584 = scalar_lea.sflag [#allocation5], 1
    %585 = vsyncpa %s584, 1
    %586 = vsyncpa [#allocation8], 1
    %587 = vsyncpa [#allocation11], 1
    %588 = vsyncpa [#allocation14], 1

</llo_original>
